<compile_context>
chip_gen: v5e
topology: v5e:2x2
jax: 0.10.0
libtpu: 0.0.40
codegen_flags: <defaults>
</compile_context>

<pallas_src>
import functools

import jax
import jax.numpy as jnp
from jax.experimental import pallas as pl
from jax.experimental.pallas import tpu as pltpu

_MIB = 1024 * 1024
# Target for the double-buffered per-step tile working set.  ~24 MiB keeps a
# 2-deep pipeline comfortably inside every generation's VMEM (v7x: 64 MiB
# physical) while being ~8x bigger than the previous ~3 MiB tiles.
_TILE_BUDGET = 24 * _MIB


def _round_up(x, n):
    return ((x + n - 1) // n) * n


# ----------------------------- kernels --------------------------------------
def _linear_kernel_fullk(x_ref, wt_ref, o_ref):
    # K is not tiled: one MXU pass per output tile, direct lane-dense store,
    # no accumulator scratch / init / finalize.
    o_ref[...] = jnp.dot(
        x_ref[...], wt_ref[...], preferred_element_type=jnp.float32
    ).astype(o_ref.dtype)


def _linear_kernel_ktiled_f32(x_ref, wt_ref, o_ref):
    # f32 output: accumulate straight into the VMEM-resident output block
    # (saves tm*tn*4 B of scratch and the finalize copy).
    @pl.when(pl.program_id(2) == 0)
    def _():
        o_ref[...] = jnp.zeros_like(o_ref)

    o_ref[...] += jnp.dot(x_ref[...], wt_ref[...], preferred_element_type=jnp.float32)


def _linear_kernel_ktiled(x_ref, wt_ref, o_ref, acc_ref):
    # non-f32 output: f32 scratch accumulator, cast on the last K step.
    @pl.when(pl.program_id(2) == 0)
    def _():
        acc_ref[...] = jnp.zeros_like(acc_ref)

    acc_ref[...] += jnp.dot(x_ref[...], wt_ref[...], preferred_element_type=jnp.float32)

    @pl.when(pl.program_id(2) == pl.num_programs(2) - 1)
    def _():
        o_ref[...] = acc_ref[...].astype(o_ref.dtype)


# ----------------------------- wrapper --------------------------------------
def _linear_forward_impl(x2d, wt, out_features):
    m, K = x2d.shape
    Kw, Npad = wt.shape
    assert Kw == K, "prepared weight K dim must match x's last dim"
    itemsize = x2d.dtype.itemsize

    def full_k_footprint(tm_, tn_):
        # double-buffered x / wt / out tiles (no accumulator needed)
        return 2 * (tm_ * K + K * tn_ + tm_ * tn_) * itemsize

    def ktiled_footprint(tm_, tn_, tk_):
        # double-buffered x / wt / out tiles + resident f32 accumulator
        return 2 * (tm_ * tk_ + tk_ * tn_ + tm_ * tn_) * itemsize + tm_ * tn_ * 4

    def m_tile(cap):
        # No M padding: a block equal to the full (possibly ragged) M extent or
        # a 128-multiple cap; the ragged last block is masked by Pallas.
        return m if m <= cap else cap

    # ---- K strategy ----------------------------------------------------------
    # Collapse the K grid axis whenever moderately sized tiles fit the VMEM
    # budget, or when K is not 128-aligned (avoids a per-call jnp.pad of x).
    use_full_k = (K % 128 != 0) or (
        full_k_footprint(m_tile(256), min(256, Npad)) <= _TILE_BUDGET
    )

    if use_full_k:
        chosen = None
        for tm_cap in (512, 256, 128):
            tm_c = m_tile(tm_cap)
            for tn_c in (512, 256, 128):
                if Npad % tn_c:
                    continue
                if full_k_footprint(tm_c, tn_c) <= _TILE_BUDGET:
                    chosen = (tm_c, tn_c)
                    break
            if chosen is not None:
                break
        if chosen is None:
            # huge unaligned-K fallback: minimum tiles, accept the footprint.
            chosen = (m_tile(128), 128)
        tm, tn = chosen
        # v7x: 2 TensorCores split the "parallel" grid axes -> for decode-style
        # (single M block) calls make sure the parallel grid has >= 2 steps.
        if pl.cdiv(m, tm) == 1 and Npad // tn < 2:
            for tn_c in (256, 128):
                if tn_c < tn and Npad % tn_c == 0 and Npad // tn_c >= 2:
                    tn = tn_c
                    break
        tk = K
        footprint = full_k_footprint(tm, tn)
    else:
        chosen = None
        for tm_cap in (512, 256, 128):
            tm_c = m_tile(tm_cap)
            for tn_c in (512, 256, 128):
                if Npad % tn_c:
                    continue
                for tk_c in (1024, 512, 256, 128):
                    if K % tk_c:
                        continue
                    if ktiled_footprint(tm_c, tn_c, tk_c) <= _TILE_BUDGET:
                        chosen = (tm_c, tn_c, tk_c)
                        break
                if chosen is not None:
                    break
            if chosen is not None:
                break
        if chosen is None:
            chosen = (m_tile(128), 128, 128)
        tm, tn, tk = chosen
        footprint = ktiled_footprint(tm, tn, tk)

    # Explicit VMEM limit: covers the double-buffered tiles with headroom.
    # ~32 MiB is within every generation's limits (v5e default scoped is only
    # 16 MiB, so the raise matters there; v7x physical VMEM is 64 MiB).
    vmem_limit = max(32 * _MIB, footprint + footprint // 4 + 2 * _MIB)

    m_grid = pl.cdiv(m, tm)
    n_grid = Npad // tn
    flops = 2 * m * K * out_features

    if use_full_k:
        # x streamed once (resident across the N sweep), W streamed once per M
        # block, output written once.
        bytes_accessed = (
            m * K * itemsize
            + m_grid * K * Npad * wt.dtype.itemsize
            + m * Npad * itemsize
        )
        cost = pl.CostEstimate(
            flops=flops, transcendentals=0, bytes_accessed=bytes_accessed
        )
        return pl.pallas_call(
            _linear_kernel_fullk,
            out_shape=jax.ShapeDtypeStruct((m, Npad), x2d.dtype),
            grid_spec=pltpu.PrefetchScalarGridSpec(
                num_scalar_prefetch=0,
                grid=(m_grid, n_grid),
                in_specs=[
                    pl.BlockSpec((tm, K), lambda i, j: (i, 0)),  # x tile
                    pl.BlockSpec((K, tn), lambda i, j: (0, j)),  # W.T tile
                ],
                out_specs=pl.BlockSpec((tm, tn), lambda i, j: (i, j)),
            ),
            compiler_params=pltpu.CompilerParams(
                dimension_semantics=("parallel", "parallel"),
                vmem_limit_bytes=vmem_limit,
            ),
            cost_estimate=cost,
        )(x2d, wt)

    # K-tiled path (large, 128-aligned K): x re-read once per N block,
    # W re-read once per M block.
    k_grid = K // tk
    bytes_accessed = (
        n_grid * m * K * itemsize
        + m_grid * K * Npad * wt.dtype.itemsize
        + m * Npad * itemsize
    )
    cost = pl.CostEstimate(
        flops=flops, transcendentals=0, bytes_accessed=bytes_accessed
    )
    if x2d.dtype == jnp.float32:
        kernel, scratch = _linear_kernel_ktiled_f32, []
    else:
        kernel, scratch = _linear_kernel_ktiled, [pltpu.VMEM((tm, tn), jnp.float32)]
    return pl.pallas_call(
        kernel,
        out_shape=jax.ShapeDtypeStruct((m, Npad), x2d.dtype),
        grid_spec=pltpu.PrefetchScalarGridSpec(
            num_scalar_prefetch=0,
            grid=(m_grid, n_grid, k_grid),
            in_specs=[
                pl.BlockSpec((tm, tk), lambda i, j, k: (i, k)),  # x tile
                pl.BlockSpec((tk, tn), lambda i, j, k: (k, j)),  # W.T tile
            ],
            out_specs=pl.BlockSpec((tm, tn), lambda i, j, k: (i, j)),
            scratch_shapes=scratch,
        ),
        compiler_params=pltpu.CompilerParams(
            dimension_semantics=("parallel", "parallel", "arbitrary"),
            vmem_limit_bytes=vmem_limit,
        ),
        cost_estimate=cost,
    )(x2d, wt)


def prepare_linear_weight(W):
    """One-time weight prep: W (out, in) -> W.T padded to (in, round_up(out,128)).

    Doing the transpose + N-pad once at init time (instead of every forward
    call) avoids re-materialising a transposed copy of W in HBM per call, and
    the N pad keeps every output store lane-dense (no masked vst)."""
    out_features, in_features = W.shape
    npad = _round_up(out_features, 128)
    wt = W.T  # (K, N)
    if npad != out_features:
        wt = jnp.pad(wt, ((0, 0), (0, npad - out_features)))
    return wt, out_features


@functools.partial(jax.jit, static_argnames=("out_features",))
def linear_forward_prepared(x, wt, out_features):
    """y[..., o] = sum_i W[o, i] * x[..., i], with wt from prepare_linear_weight."""
    orig_shape = x.shape
    K = orig_shape[-1]
    m = 1
    for d in orig_shape[:-1]:
        m *= d
    x2d = x.reshape(m, K)
    y2d = _linear_forward_impl(x2d, wt, out_features)
    if y2d.shape[1] != out_features:
        y2d = y2d[:, :out_features]
    return y2d.reshape(*orig_shape[:-1], out_features)


def linear_forward(x, W):
    """Convenience wrapper matching the torch module: y = einsum('oi,...i->...o', W, x).
    Prefer prepare_linear_weight() + linear_forward_prepared() so the weight
    transpose/pad stays out of the per-call hot path."""
    wt, out_features = prepare_linear_weight(W)
    return linear_forward_prepared(x, wt, out_features)


def init_linear_weight(key, in_features, out_features, dtype=jnp.float32):
    # Matches: trunc_normal_(W, mean=0, std=1, a=-3, b=3) * sqrt(2/(in+out))
    std = jnp.sqrt(2.0 / (in_features + out_features)).astype(jnp.float32)
    W = jax.random.truncated_normal(
        key, -3.0, 3.0, (out_features, in_features), dtype=jnp.float32
    ) * std
    return W.astype(dtype)


if __name__ == "__main__":
    key = jax.random.PRNGKey(0)
    k_w, k_x, k_w2, k_x2 = jax.random.split(key, 4)

    # Small shape with unaligned K and N: batch=2, seq=8, in=32, out=64.
    batch, seq, in_features, out_features = 2, 8, 32, 64
    W = init_linear_weight(k_w, in_features, out_features)
    x = jax.random.normal(k_x, (batch, seq, in_features), dtype=jnp.float32)

    wt, nf = prepare_linear_weight(W)  # one-time, out of the hot path
    y = jax.block_until_ready(linear_forward_prepared(x, wt, nf))
    y_ref = jnp.einsum("oi,bsi->bso", W, x)
    assert y.shape == (batch, seq, out_features)
    assert jnp.allclose(y, y_ref, atol=1e-5, rtol=1e-5), "mismatch vs reference (test 1)"

    # Second shape: 128-aligned K, N not a multiple of 256 (exercises tn pick
    # and the convenience wrapper).
    b2, s2, in2, out2 = 2, 40, 256, 384
    W2 = init_linear_weight(k_w2, in2, out2)
    x2 = jax.random.normal(k_x2, (b2, s2, in2), dtype=jnp.float32)
    y2 = jax.block_until_ready(linear_forward(x2, W2))
    y2_ref = jnp.einsum("oi,bsi->bso", W2, x2)
    assert jnp.allclose(y2, y2_ref, atol=2e-3, rtol=2e-3), "mismatch vs reference (test 2)"

    print("KERNEL_OK")
</pallas_src>

<mosaic_0001>
module attributes {stable_mosaic.version = 11 : i64} {
  func.func @_linear_kernel_fullk(%arg0: i32, %arg1: i32, %arg2: memref<16x32xf32, #tpu.memory_space<vmem>>, %arg3: memref<32x128xf32, #tpu.memory_space<vmem>>, %arg4: memref<16x128xf32, #tpu.memory_space<vmem>>) attributes {dimension_semantics = [#tpu.dimension_semantics<parallel>, #tpu.dimension_semantics<parallel>], iteration_bounds = array<i64: 1, 1>, scalar_prefetch = 0 : i64, scratch_operands = 0 : i64, tpu.core_type = #tpu.core_type<tc>, window_params = [{transform_indices = @transform_0, window_bounds = array<i64: 16, 32>}, {transform_indices = @transform_1, window_bounds = array<i64: 32, 128>}, {transform_indices = @transform_2, window_bounds = array<i64: 16, 128>}]} {
    %c0 = arith.constant 0 : index
    %c0_0 = arith.constant 0 : index
    %0 = vector.load %arg2[%c0, %c0_0] : memref<16x32xf32, #tpu.memory_space<vmem>>, vector<16x32xf32>
    %c0_1 = arith.constant 0 : index
    %c0_2 = arith.constant 0 : index
    %1 = vector.load %arg3[%c0_1, %c0_2] : memref<32x128xf32, #tpu.memory_space<vmem>>, vector<32x128xf32>
    %cst = arith.constant dense<0.000000e+00> : vector<16x128xf32>
    %2 = tpu.matmul %0, %1, %cst {dimension_numbers = #tpu.dot_dimension_numbers<[1], [0], [0], [1], [0, 0, 1, 1], [], []>} : vector<16x32xf32>, vector<32x128xf32>, vector<16x128xf32> -> vector<16x128xf32>
    %c0_3 = arith.constant 0 : index
    %c0_4 = arith.constant 0 : index
    %3 = vector.load %arg4[%c0_3, %c0_4] : memref<16x128xf32, #tpu.memory_space<vmem>>, vector<16x128xf32>
    tpu.vector_store %arg4[%c0_3, %c0_4], %2 {strides = array<i32>} : memref<16x128xf32, #tpu.memory_space<vmem>>, vector<16x128xf32>,
    return
  }
  func.func @transform_0(%arg0: i32, %arg1: i32) -> (i32, i32) {
    %c0_i32 = arith.constant 0 : i32
    %c0_i32_0 = arith.constant 0 : i32
    return %arg0, %c0_i32 : i32, i32
  }
  func.func @transform_1(%arg0: i32, %arg1: i32) -> (i32, i32) {
    %c0_i32 = arith.constant 0 : i32
    %c0_i32_0 = arith.constant 0 : i32
    return %c0_i32, %arg1 : i32, i32
  }
  func.func @transform_2(%arg0: i32, %arg1: i32) -> (i32, i32) {
    %c0_i32 = arith.constant 0 : i32
    return %arg0, %arg1 : i32, i32
  }
}

</mosaic_0001>

<llo_original>
// kernel: linear_forward_prepared.1
$region0: #{linear_forward_prepared.1}
  #allocation0 [shape = 'u32[]', space=smem, size = 0x4, offset = 0x4, fixed_abs, tag = 'smem constant byte address 0x4 - core index']
  #allocation1 [shape = 'u32[72,128]{1,0:T(1,128)}', space=vmem, size = 0x9000, scoped, tag = 'internal scratch']
  %s0 = inlined_call_operand.hbm [shape: f32[16,32], index: 0, kind: input, shape index: {}]
  %s1 = inlined_call_operand.hbm [shape: f32[32,128], index: 1, kind: input, shape index: {}]
  %s2 = inlined_call_operand.vmem [shape: f32[16,128], index: 2, kind: output, shape index: {}]
  %s3 = sld [smem:[#allocation0]]
  $region26: #{linear_forward_prepared.1} parent=0
    _
  %s5 = ssub.s32 1, %s3
  %s6 = scalar_select 0, %s5, %s3
  $region1: #{linear_forward_prepared.1} parent=0
    #allocation2 [shape = 'u8[8192]{0}', space=vmem, size = 0x2000, scoped, tag = 'input window, operand 0, single buffered']
    #allocation3 [shape = 's32[1]{0}', space=sflag, size = 0x4, scoped, tag = 'scoped memory for linear_forward_prepared.1']
    #allocation4 [shape = 'u8[16384]{0}', space=vmem, size = 0x4000, scoped, tag = 'input window, operand 1, single buffered']
    #allocation5 [shape = 's32[1]{0}', space=sflag, size = 0x4, scoped, tag = 'scoped memory for linear_forward_prepared.1']
    %7 = vsyncpa [#allocation3], 0
    %8 = vsyncpa [#allocation5], 0
    // Predicated region
    $region2: #{linear_forward_prepared.1} parent=1 // pred_check
      _
    $region3: #{linear_forward_prepared.1} parent=1 // pred_check_branch
      %10 = sbr.rel (0) target = $region5
    $region4: #{linear_forward_prepared.1} parent=1 // pred_region
      %12 = vsyncadd [#allocation3], 0
      %s13 = sshll.u32 %s0, 4
      %s14 = int_to_ptr.hbm [resolvable:$true] %s13
      %s15 = sshll.u32 [#allocation2], 4
      %s16 = int_to_ptr.vmem [resolvable:$true] %s15
      %21 = dma.hbm_to_vmem [thread:$0]  %s14, 256, %s16, [#allocation3], 128, 128, 8
    $region5: #{linear_forward_prepared.1} parent=1 // pred_fallthru
      _
    // Predicated region
    $region6: #{linear_forward_prepared.1} parent=1 // pred_check
      _
    $region7: #{linear_forward_prepared.1} parent=1 // pred_check_branch
      %23 = sbr.rel (0) target = $region9
    $region8: #{linear_forward_prepared.1} parent=1 // pred_region
      %25 = vsyncadd [#allocation5], 0
      %s26 = sshll.u32 %s1, 4
      %s27 = int_to_ptr.hbm [resolvable:$true] %s26
      %s28 = sshll.u32 [#allocation4], 4
      %s29 = int_to_ptr.vmem [resolvable:$true] %s28
      %34 = dma.hbm_to_vmem [thread:$0]  %s27, 512, %s29, [#allocation5], 128, 128, 8
    $region9: #{linear_forward_prepared.1} parent=1 // pred_fallthru
      _
    // Predicated region
    $region10: #{linear_forward_prepared.1} parent=1 // pred_check
      _
    $region11: #{linear_forward_prepared.1} parent=1 // pred_check_branch
      %36 = sbr.rel (0) target = $region13
    $region12: #{linear_forward_prepared.1} parent=1 // pred_region
      %38 = dma.done [#allocation3], 256
    $region13: #{linear_forward_prepared.1} parent=1 // pred_fallthru
      _
    // Predicated region
    $region14: #{linear_forward_prepared.1} parent=1 // pred_check
      _
    $region15: #{linear_forward_prepared.1} parent=1 // pred_check_branch
      %40 = sbr.rel (0) target = $region17
    $region16: #{linear_forward_prepared.1} parent=1 // pred_region
      %42 = dma.done [#allocation5], 512
    $region17: #{linear_forward_prepared.1} parent=1 // pred_fallthru
      _
    %v43 = vld [vmem:[#allocation2] sm:$0xff]
    %v44 = vld [vmem:[#allocation2 + $0x8] sm:$0xff]
    %v45 = vld [vmem:[#allocation4] sm:$0xff]
    %v46 = vld [vmem:[#allocation4 + $0x8] sm:$0xff]
    %v47 = vld [vmem:[#allocation4 + $0x10] sm:$0xff]
    %v48 = vld [vmem:[#allocation4 + $0x18] sm:$0xff]
    %vm49 = vcmask 261120
    %v51 = vsel %vm49, %v43, 0
    %v54 = vsel %vm49, %v44, 0
    %56 = vmatpush.msra.mxu0 0.0
    %57 = vmatpush.msra.mxu0 0.0
    %58 = vmatpush.msra.mxu0 0.0
    %59 = vmatpush.msra.mxu0 0.0
    %60 = vmatpush.msra.mxu0 0.0
    %61 = vmatpush.msra.mxu0 0.0
    %62 = vmatpush.msra.mxu0 0.0
    %63 = vmatpush.msra.mxu0 0.0
    %64 = vmatpush.msra.mxu0 0.0
    %65 = vmatpush.msra.mxu0 0.0
    %66 = vmatpush.msra.mxu0 0.0
    %67 = vmatpush.msra.mxu0 0.0
    %68 = vmatpush.msra.mxu0 %v48
    %69 = vmatpush.msra.mxu0 %v47
    %70 = vmatpush.msra.mxu0 %v46
    %71 = vmatpush.msra.mxu0 %v45
    %72 = vmatmul.f32.gmra.mxu0 %v51
    %v73 = vpop.f32.mrf.mxu0
    %v74 = vadd.f32 0.0, %v73
    %75 = vmatmul.f32.gmra.mxu0 %v54
    %v76 = vpop.f32.mrf.mxu0
    %v77 = vadd.f32 0.0, %v76
    %78 = vdwg.mxu0
    %79 = vst [vmem:[%s2] sm:$0xff] %v74
    %80 = vst [vmem:[%s2 + $0x8] sm:$0xff] %v77
    // Predicated region
    $region18: #{linear_forward_prepared.1} parent=1 // pred_check
      _
    $region19: #{linear_forward_prepared.1} parent=1 // pred_check_branch
      %82 = sbr.rel (0) target = $region21
    $region20: #{linear_forward_prepared.1} parent=1 // pred_region
      _
    $region21: #{linear_forward_prepared.1} parent=1 // pred_fallthru
      _
    // Predicated region
    $region22: #{linear_forward_prepared.1} parent=1 // pred_check
      _
    $region23: #{linear_forward_prepared.1} parent=1 // pred_check_branch
      %84 = sbr.rel (0) target = $region25
    $region24: #{linear_forward_prepared.1} parent=1 // pred_region
      _
    $region25: #{linear_forward_prepared.1} parent=1 // pred_fallthru
      _
    %85 = vsyncpa [#allocation3], 1
    %86 = vsyncpa [#allocation5], 1

</llo_original>
